<compile_context>
chip_gen: v5e
topology: v5e:2x2
jax: 0.10.0
libtpu: 0.0.40
codegen_flags: <defaults>
</compile_context>

<pallas_src>
import jax
import jax.numpy as jnp
from jax.experimental import pallas as pl
from jax.experimental.pallas import tpu as pltpu


def baseline_kernel(h_ref, w_ref, b_ref, o_ref):
    # h_ref: (1, B, D) VMEM block for timestep t
    # w_ref: (1, D)    VMEM, constant block across the grid (PyTorch weight row)
    # b_ref: (1,)      SMEM scalar bias
    # o_ref: (1, B, 1) VMEM output block for timestep t
    h = h_ref[0]                                     # (B, D)
    prod = h * w_ref[...]                            # (B, D)  VPU broadcast-mul
    acc = jnp.sum(prod, axis=-1, keepdims=True)      # (B, 1)  XLU lane reduce
    acc = jnp.maximum(acc + b_ref[0], 0.0)           # scalar bias + ReLU (VPU)
    o_ref[0] = acc.astype(o_ref.dtype)


def baseline_net_batched(h_seq, weight, bias):
    """relu(h_seq @ weight.T + bias) for a sequence of hidden states.

    h_seq:  (T, B, D) f32
    weight: (O, D)    f32, PyTorch nn.Linear layout, O == 1 (baseline head)
    bias:   (O,)      f32
    returns (T, B, O) f32
    """
    T, B, D = h_seq.shape
    O = weight.shape[0]
    assert O == 1, "VPU dot-product path is specialized for the O=1 baseline head"

    return pl.pallas_call(
        baseline_kernel,
        out_shape=jax.ShapeDtypeStruct((T, B, O), jnp.float32),
        grid=(T,),
        in_specs=[
            pl.BlockSpec((1, B, D), lambda t: (t, 0, 0)),        # h_t, new block per step
            pl.BlockSpec((1, D), lambda t: (0, 0)),              # W, resident in VMEM
            pl.BlockSpec(memory_space=pltpu.MemorySpace.SMEM),   # bias scalar, loaded once
        ],
        out_specs=pl.BlockSpec((1, B, O), lambda t: (t, 0, 0)),
        compiler_params=pltpu.CompilerParams(
            dimension_semantics=("parallel",)),  # shard timesteps over v7x's 2 TCs
    )(h_seq, weight, bias)


def baseline_net(h_t, weight, bias):
    """Single-timestep module interface: relu(h_t @ weight.T + bias) -> (B, O)."""
    return baseline_net_batched(h_t[None], weight, bias)[0]


if __name__ == "__main__":
    # Small shapes consistent with the module: hidden state (B, input_size),
    # baseline output (B, output_size) with output_size = 1; T timesteps batched.
    T, B, input_size, output_size = 8, 8, 32, 1

    key = jax.random.PRNGKey(0)
    k_h, k_w, k_b = jax.random.split(key, 3)

    # Deterministic init mimicking nn.Linear: U(-1/sqrt(fan_in), 1/sqrt(fan_in)).
    bound = 1.0 / (input_size ** 0.5)
    weight = jax.random.uniform(k_w, (output_size, input_size),
                                minval=-bound, maxval=bound, dtype=jnp.float32)
    bias = jax.random.uniform(k_b, (output_size,),
                              minval=-bound, maxval=bound, dtype=jnp.float32)
    h_seq = jax.random.normal(k_h, (T, B, input_size), dtype=jnp.float32)

    # Batched-over-timesteps path (amortizes dispatch + weight/bias DMAs).
    b_seq = baseline_net_batched(h_seq, weight, bias)
    jax.block_until_ready(b_seq)

    # Single-timestep path matching the module's forward(h_t).
    b_t = baseline_net(h_seq[0], weight, bias)
    jax.block_until_ready(b_t)

    # Correctness check against plain-JAX reference of F.relu(fc(h_t)).
    ref_seq = jnp.maximum(jnp.einsum("tbd,od->tbo", h_seq, weight) + bias, 0.0)
    assert b_seq.shape == (T, B, output_size)
    assert b_t.shape == (B, output_size)
    assert jnp.allclose(b_seq, ref_seq, atol=1e-5, rtol=1e-5)
    assert jnp.allclose(b_t, ref_seq[0], atol=1e-5, rtol=1e-5)

    print("KERNEL_OK")
</pallas_src>

<mosaic_0001>
module attributes {stable_mosaic.version = 11 : i64} {
  func.func @baseline_kernel(%arg0: i32, %arg1: memref<1x8x32xf32, #tpu.memory_space<vmem>>, %arg2: memref<1x32xf32, #tpu.memory_space<vmem>>, %arg3: memref<1xf32, #tpu.memory_space<smem>>, %arg4: memref<1x8x1xf32, #tpu.memory_space<vmem>>) attributes {dimension_semantics = [#tpu.dimension_semantics<parallel>], iteration_bounds = array<i64: 8>, scalar_prefetch = 0 : i64, scratch_operands = 0 : i64, tpu.core_type = #tpu.core_type<tc>, window_params = [{transform_indices = @transform_0, window_bounds = array<i64: 1, 8, 32>}, {pipeline_mode = #tpu.pipeline_mode<synchronous>, transform_indices = @transform_1, window_bounds = array<i64: 1, 32>}, {transform_indices = @transform_2, window_bounds = array<i64: 1>}, {transform_indices = @transform_3, window_bounds = array<i64: 1, 8, 1>}]} {
    %c0 = arith.constant 0 : index
    %c0_0 = arith.constant 0 : index
    %c0_1 = arith.constant 0 : index
    %0 = vector.load %arg1[%c0, %c0_0, %c0_1] : memref<1x8x32xf32, #tpu.memory_space<vmem>>, vector<1x8x32xf32>
    %1 = vector.shape_cast %0 : vector<1x8x32xf32> to vector<8x32xf32>
    %c0_2 = arith.constant 0 : index
    %c0_3 = arith.constant 0 : index
    %2 = vector.load %arg2[%c0_2, %c0_3] : memref<1x32xf32, #tpu.memory_space<vmem>>, vector<1x32xf32>
    %3 = vector.broadcast %2 : vector<1x32xf32> to vector<8x32xf32>
    %4 = arith.mulf %1, %3 : vector<8x32xf32>
    %cst = arith.constant dense<0.000000e+00> : vector<8xf32>
    %5 = vector.multi_reduction <add>, %4, %cst [1] : vector<8x32xf32> to vector<8xf32>
    %6 = vector.shape_cast %5 : vector<8xf32> to vector<8x1xf32>
    %c0_4 = arith.constant 0 : index
    %7 = memref.load %arg3[%c0_4] : memref<1xf32, #tpu.memory_space<smem>>
    %8 = vector.broadcast %7 : f32 to vector<8x1xf32>
    %9 = arith.addf %6, %8 : vector<8x1xf32>
    %cst_5 = arith.constant 0.000000e+00 : f32
    %10 = vector.broadcast %cst_5 : f32 to vector<8x1xf32>
    %11 = arith.maximumf %9, %10 : vector<8x1xf32>
    %c0_6 = arith.constant 0 : index
    %c0_7 = arith.constant 0 : index
    %c0_8 = arith.constant 0 : index
    %12 = vector.load %arg4[%c0_6, %c0_7, %c0_8] : memref<1x8x1xf32, #tpu.memory_space<vmem>>, vector<1x8x1xf32>
    %13 = vector.shape_cast %12 : vector<1x8x1xf32> to vector<8x1xf32>
    %14 = vector.shape_cast %11 : vector<8x1xf32> to vector<1x8x1xf32>
    tpu.vector_store %arg4[%c0_6, %c0_7, %c0_8], %14 {strides = array<i32>} : memref<1x8x1xf32, #tpu.memory_space<vmem>>, vector<1x8x1xf32>,
    return
  }
  func.func @transform_0(%arg0: i32) -> (i32, i32, i32) {
    %c0_i32 = arith.constant 0 : i32
    %c0_i32_0 = arith.constant 0 : i32
    %c0_i32_1 = arith.constant 0 : i32
    return %arg0, %c0_i32, %c0_i32_0 : i32, i32, i32
  }
  func.func @transform_1(%arg0: i32) -> (i32, i32) {
    %c0_i32 = arith.constant 0 : i32
    %c0_i32_0 = arith.constant 0 : i32
    %c0_i32_1 = arith.constant 0 : i32
    return %c0_i32, %c0_i32_0 : i32, i32
  }
  func.func @transform_2(%arg0: i32) -> i32 {
    %c0_i32 = arith.constant 0 : i32
    %c0_i32_0 = arith.constant 0 : i32
    return %c0_i32 : i32
  }
  func.func @transform_3(%arg0: i32) -> (i32, i32, i32) {
    %c0_i32 = arith.constant 0 : i32
    %c0_i32_0 = arith.constant 0 : i32
    %c0_i32_1 = arith.constant 0 : i32
    return %arg0, %c0_i32, %c0_i32_0 : i32, i32, i32
  }
}

</mosaic_0001>

<llo_original>
// kernel: tpu_custom_call.1
$region0: #{tpu_custom_call.1}
  #allocation0 [shape = 'u32[]', space=smem, size = 0x4, offset = 0x4, fixed_abs, tag = 'smem constant byte address 0x4 - core index']
  #allocation1 [shape = 'u32[72,128]{1,0:T(1,128)}', space=vmem, size = 0x9000, scoped, tag = 'internal scratch']
  #allocation2 [shape = 'f32[1]{0:T(128)S(6)}', space=smem, size = 0x200, scoped, tag = 'scoped memory for tpu_custom_call.1']
  %s0 = inlined_call_operand.hbm [shape: f32[8,8,32], index: 0, kind: input, shape index: {}]
  %s1 = inlined_call_operand.vmem [shape: f32[1,32], index: 1, kind: input, shape index: {}]
  %s2 = inlined_call_operand.<no memory space> [shape: f32[1], index: 2, kind: input, shape index: {}]
  %s3 = inlined_call_operand.vmem [shape: f32[8,8,1], index: 3, kind: output, shape index: {}]
  %s4 = sld [smem:[#allocation0]]
  $region49: #{tpu_custom_call.1} parent=0
    _
  %s6 = ssub.s32 1, %s4
  %s7 = scalar_select 0, %s6, %s4
  %8 = sst [smem:[#allocation2]] %s2
  $region1: #{tpu_custom_call.1} parent=0
    #allocation3 [shape = 'u8[8192]{0}', space=vmem, size = 0x2000, scoped, tag = 'input window, operand 0']
    #allocation4 [shape = 's32[2]{0}', space=sflag, size = 0x8, scoped, tag = 'scoped memory for tpu_custom_call.1']
    %9 = vsyncpa [#allocation4], 0
    %s10 = scalar_lea.sflag [#allocation4], 1
    %11 = vsyncpa %s10, 0
    loop: start=0, step=1, limit=10
    $region2: #{tpu_custom_call.1} parent=1 // loop_pre_header
      _
    $region3: #{tpu_custom_call.1} parent=1 // loop_header
      %s13 = sphi 0, %s17
      %p14 = scmp.ge.s32.totalorder %s13, 10
      %s23 = sphi 0, %s25
      %s26 = sphi 0, %s23
      %s27 = sphi 0, %s26
      %s43 = sphi 0, %s27
      %s47 = sphi 0, %s47
      %s49 = sphi 0, %s47
      %s50 = sphi 0, %s49
      %s64 = sphi 0, %s50
      %s68 = sphi 0, %s68
      %s70 = sphi 0, %s68
      %s71 = sphi 0, %s70
      %s85 = sphi 0, %s71
      %s91 = sphi 0, %s93
      %s94 = sphi 0, %s91
      %s95 = sphi 0, %s94
      %s111 = sphi 0, %s95
    $region4: #{tpu_custom_call.1} parent=1 // loop_header_branch
      %16 = sbr.rel (%p14) target = $region8
    $region5: #{tpu_custom_call.1} parent=1 // loop_body
      %s18 = ssub.s32 %s13, 1
      %s19 = ssub.s32 %s13, 2
      %s20 = sadd.s32 %s13, 1
      %s21 = ssub.s32 %s13, %s20
      %p22 = scmp.eq.s32.totalorder %s21, 0
      %s24 = sadd.s32 %s23, 1
      %s25 = scalar_select %p22, %s23, %s24
      %p28 = pneg %p22
      %p29 = scmp.eq.s32.totalorder %s13, 7
      %p30 = por %p28, %p29
      %p31 = scmp.ne.s32.totalorder %s23, %s26
      %p32 = scmp.eq.s32.totalorder %s13, 0
      %p33 = por %p31, %p32
      %p34 = scmp.ne.s32.totalorder %s23, %s26
      %p35 = scmp.eq.s32.totalorder %s18, 7
      %p36 = por %p34, %p35
      %p37 = scmp.ne.s32.totalorder %s26, %s27
      %p38 = scmp.eq.s32.totalorder %s18, 0
      %p39 = por %p37, %p38
      %p40 = scmp.ne.s32.totalorder %s26, %s27
      %p41 = scmp.eq.s32.totalorder %s19, 7
      %p42 = por %p40, %p41
      %p44 = scmp.ne.s32.totalorder %s27, %s43
      %p45 = scmp.eq.s32.totalorder %s19, 0
      %p46 = por %p44, %p45
      %s48 = sadd.s32 %s47, 1
      %p51 = scmp.eq.s32.totalorder %s13, 7
      %p52 = scmp.ne.s32.totalorder %s47, %s49
      %p53 = scmp.eq.s32.totalorder %s13, 0
      %p54 = por %p52, %p53
      %p55 = scmp.ne.s32.totalorder %s47, %s49
      %p56 = scmp.eq.s32.totalorder %s18, 7
      %p57 = por %p55, %p56
      %p58 = scmp.ne.s32.totalorder %s49, %s50
      %p59 = scmp.eq.s32.totalorder %s18, 0
      %p60 = por %p58, %p59
      %p61 = scmp.ne.s32.totalorder %s49, %s50
      %p62 = scmp.eq.s32.totalorder %s19, 7
      %p63 = por %p61, %p62
      %p65 = scmp.ne.s32.totalorder %s50, %s64
      %p66 = scmp.eq.s32.totalorder %s19, 0
      %p67 = por %p65, %p66
      %s69 = sadd.s32 %s68, 1
      %p72 = scmp.eq.s32.totalorder %s13, 7
      %p73 = scmp.ne.s32.totalorder %s68, %s70
      %p74 = scmp.eq.s32.totalorder %s13, 0
      %p75 = por %p73, %p74
      %p76 = scmp.ne.s32.totalorder %s68, %s70
      %p77 = scmp.eq.s32.totalorder %s18, 7
      %p78 = por %p76, %p77
      %p79 = scmp.ne.s32.totalorder %s70, %s71
      %p80 = scmp.eq.s32.totalorder %s18, 0
      %p81 = por %p79, %p80
      %p82 = scmp.ne.s32.totalorder %s70, %s71
      %p83 = scmp.eq.s32.totalorder %s19, 7
      %p84 = por %p82, %p83
      %p86 = scmp.ne.s32.totalorder %s71, %s85
      %p87 = scmp.eq.s32.totalorder %s19, 0
      %p88 = por %p86, %p87
      %s89 = ssub.s32 %s13, %s20
      %p90 = scmp.eq.s32.totalorder %s89, 0
      %s92 = sadd.s32 %s91, 1
      %s93 = scalar_select %p90, %s91, %s92
      %p96 = pneg %p90
      %p97 = scmp.eq.s32.totalorder %s13, 7
      %p98 = por %p96, %p97
      %p99 = scmp.ne.s32.totalorder %s91, %s94
      %p100 = scmp.eq.s32.totalorder %s13, 0
      %p101 = por %p99, %p100
      %p102 = scmp.ne.s32.totalorder %s91, %s94
      %p103 = scmp.eq.s32.totalorder %s18, 7
      %p104 = por %p102, %p103
      %p105 = scmp.ne.s32.totalorder %s94, %s95
      %p106 = scmp.eq.s32.totalorder %s18, 0
      %p107 = por %p105, %p106
      %p108 = scmp.ne.s32.totalorder %s94, %s95
      %p109 = scmp.eq.s32.totalorder %s19, 7
      %p110 = por %p108, %p109
      %p112 = scmp.ne.s32.totalorder %s95, %s111
      %p113 = scmp.eq.s32.totalorder %s19, 0
      %p114 = por %p112, %p113
      %p115 = scmp.le.s32.totalorder 1, %s13
      %p116 = scmp.lt.s32.totalorder %s13, 9
      %p117 = pnand %p115, %p116
      %p118 = pneg %p117
      // Predicated region
      $region9: #{tpu_custom_call.1} parent=5 // pred_check
        _
      $region10: #{tpu_custom_call.1} parent=5 // pred_check_branch
        %120 = sbr.rel (%p117) target = $region12
      $region11: #{tpu_custom_call.1} parent=5 // pred_region
        %s121 = ssub.s32 %s13, 1
        // Predicated region
        $region13: #{tpu_custom_call.1} parent=11 // pred_check
          %p122 = pneg %p60
        $region14: #{tpu_custom_call.1} parent=11 // pred_check_branch
          %124 = sbr.rel (%p122) target = $region16
        $region15: #{tpu_custom_call.1} parent=11 // pred_region
          _
        $region16: #{tpu_custom_call.1} parent=11 // pred_fallthru
          _
        // Predicated region
        $region17: #{tpu_custom_call.1} parent=11 // pred_check
          %p125 = pneg %p81
        $region18: #{tpu_custom_call.1} parent=11 // pred_check_branch
          %127 = sbr.rel (%p125) target = $region20
        $region19: #{tpu_custom_call.1} parent=11 // pred_region
          _
        $region20: #{tpu_custom_call.1} parent=11 // pred_fallthru
          _
      $region12: #{tpu_custom_call.1} parent=5 // pred_fallthru
        _
      %p128 = scmp.lt.s32.totalorder %s13, 8
      // Predicated region
      $region21: #{tpu_custom_call.1} parent=5 // pred_check
        %p129 = pneg %p128
      $region22: #{tpu_custom_call.1} parent=5 // pred_check_branch
        %131 = sbr.rel (%p129) target = $region24
      $region23: #{tpu_custom_call.1} parent=5 // pred_region
        // Predicated region
        $region25: #{tpu_custom_call.1} parent=23 // pred_check
          %p132 = pneg %p33
        $region26: #{tpu_custom_call.1} parent=23 // pred_check_branch
          %134 = sbr.rel (%p132) target = $region28
        $region27: #{tpu_custom_call.1} parent=23 // pred_region
          %s135 = sand.u32 %s23, 1
          %s136 = scalar_lea.sflag [#allocation4], %s135
          %s137 = sand.u32 %s23, 1
          %s138 = smul.addr %s137, 8
          %s139 = scalar_lea.vmem [#allocation3], %s138
          %141 = vsyncadd %s136, 0
          %s142 = smul.addr %s13, 8
          %s143 = scalar_lea.hbm %s0, %s142
          %s145 = sshll.u32 %s143, 4
          %s146 = int_to_ptr.hbm [resolvable:$true] %s145
          %s147 = sshll.u32 %s139, 4
          %s148 = int_to_ptr.vmem [resolvable:$true] %s147
          %150 = dma.hbm_to_vmem [thread:$0]  %s146, 128, %s148, %s136
        $region28: #{tpu_custom_call.1} parent=23 // pred_fallthru
          _
      $region24: #{tpu_custom_call.1} parent=5 // pred_fallthru
        _
      %p151 = scmp.le.s32.totalorder 1, %s13
      %p152 = scmp.lt.s32.totalorder %s13, 9
      %p153 = pnand %p151, %p152
      %p154 = pneg %p153
      // Predicated region
      $region29: #{tpu_custom_call.1} parent=5 // pred_check
        _
      $region30: #{tpu_custom_call.1} parent=5 // pred_check_branch
        %156 = sbr.rel (%p153) target = $region32
      $region31: #{tpu_custom_call.1} parent=5 // pred_region
        %s157 = ssub.s32 %s13, 1
        %s158 = sand.u32 %s26, 1
        %s159 = scalar_lea.sflag [#allocation4], %s158
        %s160 = sand.u32 %s26, 1
        %s161 = smul.addr %s160, 8
        %s162 = scalar_lea.vmem [#allocation3], %s161
        // Predicated region
        $region33: #{tpu_custom_call.1} parent=31 // pred_check
          %p163 = pneg %p39
        $region34: #{tpu_custom_call.1} parent=31 // pred_check_branch
          %165 = sbr.rel (%p163) target = $region36
        $region35: #{tpu_custom_call.1} parent=31 // pred_region
          %167 = dma.done %s159, 128
        $region36: #{tpu_custom_call.1} parent=31 // pred_fallthru
          _
        %s168 = sand.u32 %s26, 1
        %s169 = scalar_lea.sflag [#allocation4], %s168
        %s170 = sand.u32 %s26, 1
        %s171 = smul.addr %s170, 8
        %s172 = scalar_lea.vmem [#allocation3], %s171
        %p173 = pneg %p39
        %p174 = pneg %p36
        %p175 = pneg %p60
        %p176 = pneg %p57
        %p177 = pneg %p81
        %p178 = pneg %p78
        %p179 = pneg %p107
        %p180 = pneg %p104
        %p181 = scmp.lt.s32.totalorder %s18, 7
        %s182 = scalar_select %p181, %s18, 7
        %s183 = smul.addr %s182, 8
        %s184 = scalar_lea.vmem %s3, %s183
        %p185 = scmp.lt.s32.totalorder %s18, 7
        %s186 = scalar_select %p185, %s18, 7
        %s187 = smul.addr %s186, 8
        %s188 = scalar_lea.vmem %s3, %s187
        %v189 = vld [vmem:[%s162] sm:$0xff]
        %v190 = vld [vmem:[%s1] sm:$0x1]
        %v192 = vperm.slane %v190, 0
        %v194 = vmul.f32 %v189, %v192
        %vm195 = vcmask 261120
        %v196 = vsel %vm195, %v194, 0.0
        %197 = vadd.xlane.f32.xlu0 %v196
        %v198 = vpop.xlane.xlu0 %197
        %s199 = sld [smem:[#allocation2]]
        %v200 = vstv %s199
        %v201 = vadd.f32 %v198, %v200
        %v202 = vmax.f32 %v201, 0.0
        %vm203 = vcmask 7168
        %204 = vst.msk [vmem:[%s188] sm:$0xff] %vm203, %v202
        %p205 = scmp.lt.s32.totalorder %s18, 7
        %s206 = scalar_select %p205, %s18, 7
        %s207 = smul.addr %s206, 8
        %s208 = scalar_lea.vmem %s3, %s207
        // Predicated region
        $region37: #{tpu_custom_call.1} parent=31 // pred_check
          %p209 = pneg %p104
        $region38: #{tpu_custom_call.1} parent=31 // pred_check_branch
          %211 = sbr.rel (%p209) target = $region40
        $region39: #{tpu_custom_call.1} parent=31 // pred_region
          _
        $region40: #{tpu_custom_call.1} parent=31 // pred_fallthru
          _
      $region32: #{tpu_custom_call.1} parent=5 // pred_fallthru
        _
      %p212 = scmp.le.s32.totalorder 2, %s13
      // Predicated region
      $region41: #{tpu_custom_call.1} parent=5 // pred_check
        %p213 = pneg %p212
      $region42: #{tpu_custom_call.1} parent=5 // pred_check_branch
        %215 = sbr.rel (%p213) target = $region44
      $region43: #{tpu_custom_call.1} parent=5 // pred_region
        %s216 = ssub.s32 %s13, 2
        // Predicated region
        $region45: #{tpu_custom_call.1} parent=43 // pred_check
          %p217 = pneg %p110
        $region46: #{tpu_custom_call.1} parent=43 // pred_check_branch
          %219 = sbr.rel (%p217) target = $region48
        $region47: #{tpu_custom_call.1} parent=43 // pred_region
          %p220 = scmp.lt.s32.totalorder %s19, 7
          %s221 = scalar_select %p220, %s19, 7
          %s222 = smul.addr %s221, 8
          %s223 = scalar_lea.vmem %s3, %s222
        $region48: #{tpu_custom_call.1} parent=43 // pred_fallthru
          _
      $region44: #{tpu_custom_call.1} parent=5 // pred_fallthru
        _
    $region6: #{tpu_custom_call.1} parent=1 // loop_footer
      %s17 = sadd.s32 1, %s13
    $region7: #{tpu_custom_call.1} parent=1 // loop_footer_branch
      %12 = sbr.rel target = $region3
    $region8: #{tpu_custom_call.1} parent=1 // loop_exit
      _
    %224 = vsyncpa [#allocation4], 1
    %s225 = scalar_lea.sflag [#allocation4], 1
    %226 = vsyncpa %s225, 1

</llo_original>
